<compile_context>
chip_gen: v7x
topology: tpu7x:2x2x1
jax: 0.10.0
libtpu: 0.0.40
codegen_flags: <defaults>
</compile_context>

<pallas_src>
import functools

import jax
import jax.numpy as jnp
from jax.experimental import pallas as pl
from jax.experimental.pallas import tpu as pltpu


def _head_kernel(x_ref, w3_ref, shift_ref, w1t_ref, b1_ref, col_ref, o_ref, *, H, W):
    """One grid step = one batch element (channel-major, flattened spatial).

    x_ref    : (1, C, H*W)   input feature map
    w3_ref   : (9, C, C)     3x3 conv weights, BN scale folded in; [tap, c_out, c_in]
    shift_ref: (C, 1)        folded BN shift  (beta - mean * scale)
    w1t_ref  : (NC, C)       1x1 conv weights (transposed)
    b1_ref   : (NC, 1)       1x1 conv bias
    col_ref  : (1, H*W)      column (w) index of every flattened position
    o_ref    : (1, NC, H*W)  output feature map
    """
    HW = H * W
    C = x_ref.shape[1]
    x = x_ref[0]                                               # (C, HW)
    pos = jax.lax.broadcasted_iota(jnp.int32, (C, HW), 1)      # flattened position p
    col = jnp.broadcast_to(col_ref[...], (C, HW))              # p % W (precomputed)

    # 3x3 conv (stride 1, pad 1): nine lane-rolled taps of the flattened map,
    # boundary handled by masking, each contracted against its (C_out, C_in)
    # weight slab on the MXU.  No padded copies, no strided slice/reshape.
    acc = jnp.zeros((C, HW), jnp.float32)
    tap_idx = 0
    for dy in (-1, 0, 1):
        for dx in (-1, 0, 1):
            d = dy * W + dx
            if d == 0:
                tap = x
            else:
                rolled = pltpu.roll(x, (-d) % HW, axis=1)      # rolled[p] == x[p + d]
                conds = []
                if dy == -1:
                    conds.append(pos >= W)                     # source row h-1 exists
                elif dy == 1:
                    conds.append(pos < (H - 1) * W)            # source row h+1 exists
                if dx == -1:
                    conds.append(col >= 1)                     # source col w-1 exists
                elif dx == 1:
                    conds.append(col < W - 1)                  # source col w+1 exists
                valid = conds[0]
                for c in conds[1:]:
                    valid = jnp.logical_and(valid, c)
                tap = jnp.where(valid, rolled, 0.0)
            acc = acc + jnp.dot(w3_ref[tap_idx], tap,
                                preferred_element_type=jnp.float32)
            tap_idx += 1

    # Folded BatchNorm shift + ReLU (scale already folded into the 3x3 weights).
    y = jnp.maximum(acc + shift_ref[...], 0.0)

    # Dropout(p_drop=0.0) / eval mode: identity.

    # 1x1 conv + bias; output stays lane-dense (H*W on the 128-lane axis).
    out = jnp.dot(w1t_ref[...], y, preferred_element_type=jnp.float32) + b1_ref[...]
    o_ref[0] = out.astype(o_ref.dtype)


@jax.jit
def head_forward(x, w3, bn_gamma, bn_beta, bn_mean, bn_var, w1, b1, eps=1e-5):
    """Head forward pass. x: (N, C, H, W) NCHW. Returns (N, num_classes, H, W)."""
    N, C, H, W = x.shape
    NC = w1.shape[-1]
    HW = H * W

    # --- parameter folding (tiny, trace-time; no activation HBM traffic) ---
    scale = bn_gamma / jnp.sqrt(bn_var + eps)                              # (C,)
    shift = (bn_beta - bn_mean * scale).reshape(C, 1).astype(jnp.float32)
    # w3 is (ky, kx, c_in, c_out): fold BN scale over c_out, lay out (tap, c_out, c_in).
    w3f = jnp.transpose(w3 * scale[None, None, None, :], (0, 1, 3, 2))
    w3f = w3f.reshape(9, C, C).astype(jnp.float32)
    w1t = jnp.transpose(w1, (1, 0)).astype(jnp.float32)                    # (NC, C)
    b1c = b1.reshape(NC, 1).astype(jnp.float32)
    col_ids = (jnp.arange(HW, dtype=jnp.int32) % W).reshape(1, HW)

    # NCHW -> (N, C, H*W): contiguous reshape (free), unlike pad/transpose round trips.
    x_flat = x.reshape(N, C, HW)

    kernel = functools.partial(_head_kernel, H=H, W=W)
    flops = 2 * N * HW * C * (9 * C + NC)
    bytes_accessed = 4 * (N * C * HW + N * NC * HW + 9 * C * C + C + NC * C + NC + HW)

    out_flat = pl.pallas_call(
        kernel,
        out_shape=jax.ShapeDtypeStruct((N, NC, HW), x.dtype),
        grid_spec=pltpu.PrefetchScalarGridSpec(
            num_scalar_prefetch=0,
            grid=(N,),
            in_specs=[
                pl.BlockSpec((1, C, HW), lambda n: (n, 0, 0)),
                pl.BlockSpec((9, C, C), lambda n: (0, 0, 0)),
                pl.BlockSpec((C, 1), lambda n: (0, 0)),
                pl.BlockSpec((NC, C), lambda n: (0, 0)),
                pl.BlockSpec((NC, 1), lambda n: (0, 0)),
                pl.BlockSpec((1, HW), lambda n: (0, 0)),
            ],
            out_specs=pl.BlockSpec((1, NC, HW), lambda n: (n, 0, 0)),
        ),
        compiler_params=pltpu.CompilerParams(
            dimension_semantics=("parallel",),
            vmem_limit_bytes=32 * 1024 * 1024,
        ),
        cost_estimate=pl.CostEstimate(
            flops=flops, transcendentals=0, bytes_accessed=bytes_accessed),
    )(x_flat, w3f, shift, w1t, b1c, col_ids)

    # (N, NC, H*W) -> (N, NC, H, W): contiguous reshape, free.
    return out_flat.reshape(N, NC, H, W)


def _reference(x_nchw, w3, bn_gamma, bn_beta, bn_mean, bn_var, w1, b1, eps=1e-5):
    """Pure-JAX reference (NCHW, mirrors the PyTorch module) for correctness."""
    w3_oihw = jnp.transpose(w3, (3, 2, 0, 1))
    y = jax.lax.conv_general_dilated(
        x_nchw.astype(jnp.float32), w3_oihw.astype(jnp.float32),
        window_strides=(1, 1), padding=((1, 1), (1, 1)),
        dimension_numbers=("NCHW", "OIHW", "NCHW"))
    scale = (bn_gamma / jnp.sqrt(bn_var + eps)).reshape(1, -1, 1, 1)
    shift = (bn_beta - bn_mean * (bn_gamma / jnp.sqrt(bn_var + eps))).reshape(1, -1, 1, 1)
    y = jnp.maximum(y * scale + shift, 0.0)
    w1_oihw = jnp.transpose(w1, (1, 0)).reshape(w1.shape[1], w1.shape[0], 1, 1)
    z = jax.lax.conv_general_dilated(
        y, w1_oihw.astype(jnp.float32),
        window_strides=(1, 1), padding="VALID",
        dimension_numbers=("NCHW", "OIHW", "NCHW"))
    return z + b1.reshape(1, -1, 1, 1)


if __name__ == "__main__":
    # Small shapes consistent with the module: batch=2, in_channels=4, 16x16, classes=8.
    N, C, H, W = 2, 4, 16, 16
    NUM_CLASSES = 8

    key = jax.random.PRNGKey(0)
    k_x, k_w3, k_w1, k_b1, k_bn = jax.random.split(key, 5)

    x = jax.random.normal(k_x, (N, C, H, W), dtype=jnp.float32)

    w3 = jax.random.normal(k_w3, (3, 3, C, C), dtype=jnp.float32) * 0.1     # 3x3 conv (no bias)
    bn_gamma = jnp.linspace(0.9, 1.1, C, dtype=jnp.float32)
    bn_beta = jnp.linspace(-0.1, 0.1, C, dtype=jnp.float32)
    bn_mean = jax.random.normal(k_bn, (C,), dtype=jnp.float32) * 0.05
    bn_var = jnp.ones((C,), dtype=jnp.float32)
    w1 = jax.random.normal(k_w1, (C, NUM_CLASSES), dtype=jnp.float32) * 0.1  # 1x1 conv
    b1 = jax.random.normal(k_b1, (NUM_CLASSES,), dtype=jnp.float32) * 0.1

    out = head_forward(x, w3, bn_gamma, bn_beta, bn_mean, bn_var, w1, b1)
    out = jax.block_until_ready(out)

    ref = _reference(x, w3, bn_gamma, bn_beta, bn_mean, bn_var, w1, b1)
    assert out.shape == (N, NUM_CLASSES, H, W), out.shape
    assert jnp.allclose(out, ref, atol=1e-4, rtol=1e-4), "mismatch vs reference"

    print("KERNEL_OK")
</pallas_src>

<mosaic_0001>
module attributes {stable_mosaic.version = 11 : i64} {
  func.func @_head_kernel(%arg0: i32, %arg1: memref<1x4x256xf32, #tpu.memory_space<vmem>>, %arg2: memref<9x4x4xf32, #tpu.memory_space<vmem>>, %arg3: memref<4x1xf32, #tpu.memory_space<vmem>>, %arg4: memref<8x4xf32, #tpu.memory_space<vmem>>, %arg5: memref<8x1xf32, #tpu.memory_space<vmem>>, %arg6: memref<1x256xi32, #tpu.memory_space<vmem>>, %arg7: memref<1x8x256xf32, #tpu.memory_space<vmem>>) attributes {dimension_semantics = [#tpu.dimension_semantics<parallel>], iteration_bounds = array<i64: 2>, scalar_prefetch = 0 : i64, scratch_operands = 0 : i64, tpu.core_type = #tpu.core_type<tc>, window_params = [{transform_indices = @transform_0, window_bounds = array<i64: 1, 4, 256>}, {pipeline_mode = #tpu.pipeline_mode<synchronous>, transform_indices = @transform_1, window_bounds = array<i64: 9, 4, 4>}, {pipeline_mode = #tpu.pipeline_mode<synchronous>, transform_indices = @transform_2, window_bounds = array<i64: 4, 1>}, {pipeline_mode = #tpu.pipeline_mode<synchronous>, transform_indices = @transform_3, window_bounds = array<i64: 8, 4>}, {pipeline_mode = #tpu.pipeline_mode<synchronous>, transform_indices = @transform_4, window_bounds = array<i64: 8, 1>}, {pipeline_mode = #tpu.pipeline_mode<synchronous>, transform_indices = @transform_5, window_bounds = array<i64: 1, 256>}, {transform_indices = @transform_6, window_bounds = array<i64: 1, 8, 256>}]} {
    %c0 = arith.constant 0 : index
    %c0_0 = arith.constant 0 : index
    %c0_1 = arith.constant 0 : index
    %0 = vector.load %arg1[%c0, %c0_0, %c0_1] : memref<1x4x256xf32, #tpu.memory_space<vmem>>, vector<1x4x256xf32>
    %1 = vector.shape_cast %0 : vector<1x4x256xf32> to vector<4x256xf32>
    %2 = tpu.iota {dimensions = array<i32: 1>} : vector<4x256xi32>
    %c0_2 = arith.constant 0 : index
    %c0_3 = arith.constant 0 : index
    %3 = vector.load %arg6[%c0_2, %c0_3] : memref<1x256xi32, #tpu.memory_space<vmem>>, vector<1x256xi32>
    %4 = vector.shape_cast %3 : vector<1x256xi32> to vector<1x256xi32>
    %5 = vector.broadcast %4 : vector<1x256xi32> to vector<4x256xi32>
    %cst = arith.constant 0.000000e+00 : f32
    %6 = vector.broadcast %cst : f32 to vector<4x256xf32>
    %c17_i32 = arith.constant 17 : i32
    %7 = tpu.dynamic_rotate %1 by %c17_i32 dim 1 : vector<4x256xf32>, i32 -> vector<4x256xf32>
    %c16_i32 = arith.constant 16 : i32
    %8 = vector.broadcast %c16_i32 : i32 to vector<4x256xi32>
    %9 = arith.cmpi sge, %2, %8 : vector<4x256xi32>
    %c1_i32 = arith.constant 1 : i32
    %10 = vector.broadcast %c1_i32 : i32 to vector<4x256xi32>
    %11 = arith.cmpi sge, %5, %10 : vector<4x256xi32>
    %12 = arith.andi %9, %11 : vector<4x256xi1>
    %cst_4 = arith.constant 0.000000e+00 : f32
    %13 = vector.broadcast %cst_4 : f32 to vector<4x256xf32>
    %14 = arith.select %12, %7, %13 : vector<4x256xi1>, vector<4x256xf32>
    %c0_5 = arith.constant 0 : index
    %c0_6 = arith.constant 0 : index
    %c0_7 = arith.constant 0 : index
    %15 = vector.load %arg2[%c0_5, %c0_6, %c0_7] : memref<9x4x4xf32, #tpu.memory_space<vmem>>, vector<1x4x4xf32>
    %16 = vector.shape_cast %15 : vector<1x4x4xf32> to vector<4x4xf32>
    %cst_8 = arith.constant dense<0.000000e+00> : vector<4x256xf32>
    %17 = tpu.matmul %16, %14, %cst_8 {dimension_numbers = #tpu.dot_dimension_numbers<[1], [0], [0], [1], [0, 0, 1, 1], [], []>} : vector<4x4xf32>, vector<4x256xf32>, vector<4x256xf32> -> vector<4x256xf32>
    %18 = arith.addf %6, %17 : vector<4x256xf32>
    %c16_i32_9 = arith.constant 16 : i32
    %19 = tpu.dynamic_rotate %1 by %c16_i32_9 dim 1 : vector<4x256xf32>, i32 -> vector<4x256xf32>
    %c16_i32_10 = arith.constant 16 : i32
    %20 = vector.broadcast %c16_i32_10 : i32 to vector<4x256xi32>
    %21 = arith.cmpi sge, %2, %20 : vector<4x256xi32>
    %cst_11 = arith.constant 0.000000e+00 : f32
    %22 = vector.broadcast %cst_11 : f32 to vector<4x256xf32>
    %23 = arith.select %21, %19, %22 : vector<4x256xi1>, vector<4x256xf32>
    %c1 = arith.constant 1 : index
    %c0_12 = arith.constant 0 : index
    %c0_13 = arith.constant 0 : index
    %24 = vector.load %arg2[%c1, %c0_12, %c0_13] : memref<9x4x4xf32, #tpu.memory_space<vmem>>, vector<1x4x4xf32>
    %25 = vector.shape_cast %24 : vector<1x4x4xf32> to vector<4x4xf32>
    %cst_14 = arith.constant dense<0.000000e+00> : vector<4x256xf32>
    %26 = tpu.matmul %25, %23, %cst_14 {dimension_numbers = #tpu.dot_dimension_numbers<[1], [0], [0], [1], [0, 0, 1, 1], [], []>} : vector<4x4xf32>, vector<4x256xf32>, vector<4x256xf32> -> vector<4x256xf32>
    %27 = arith.addf %18, %26 : vector<4x256xf32>
    %c15_i32 = arith.constant 15 : i32
    %28 = tpu.dynamic_rotate %1 by %c15_i32 dim 1 : vector<4x256xf32>, i32 -> vector<4x256xf32>
    %c16_i32_15 = arith.constant 16 : i32
    %29 = vector.broadcast %c16_i32_15 : i32 to vector<4x256xi32>
    %30 = arith.cmpi sge, %2, %29 : vector<4x256xi32>
    %c15_i32_16 = arith.constant 15 : i32
    %31 = vector.broadcast %c15_i32_16 : i32 to vector<4x256xi32>
    %32 = arith.cmpi slt, %5, %31 : vector<4x256xi32>
    %33 = arith.andi %30, %32 : vector<4x256xi1>
    %cst_17 = arith.constant 0.000000e+00 : f32
    %34 = vector.broadcast %cst_17 : f32 to vector<4x256xf32>
    %35 = arith.select %33, %28, %34 : vector<4x256xi1>, vector<4x256xf32>
    %c2 = arith.constant 2 : index
    %c0_18 = arith.constant 0 : index
    %c0_19 = arith.constant 0 : index
    %36 = vector.load %arg2[%c2, %c0_18, %c0_19] : memref<9x4x4xf32, #tpu.memory_space<vmem>>, vector<1x4x4xf32>
    %37 = vector.shape_cast %36 : vector<1x4x4xf32> to vector<4x4xf32>
    %cst_20 = arith.constant dense<0.000000e+00> : vector<4x256xf32>
    %38 = tpu.matmul %37, %35, %cst_20 {dimension_numbers = #tpu.dot_dimension_numbers<[1], [0], [0], [1], [0, 0, 1, 1], [], []>} : vector<4x4xf32>, vector<4x256xf32>, vector<4x256xf32> -> vector<4x256xf32>
    %39 = arith.addf %27, %38 : vector<4x256xf32>
    %c1_i32_21 = arith.constant 1 : i32
    %40 = tpu.dynamic_rotate %1 by %c1_i32_21 dim 1 : vector<4x256xf32>, i32 -> vector<4x256xf32>
    %c1_i32_22 = arith.constant 1 : i32
    %41 = vector.broadcast %c1_i32_22 : i32 to vector<4x256xi32>
    %42 = arith.cmpi sge, %5, %41 : vector<4x256xi32>
    %cst_23 = arith.constant 0.000000e+00 : f32
    %43 = vector.broadcast %cst_23 : f32 to vector<4x256xf32>
    %44 = arith.select %42, %40, %43 : vector<4x256xi1>, vector<4x256xf32>
    %c3 = arith.constant 3 : index
    %c0_24 = arith.constant 0 : index
    %c0_25 = arith.constant 0 : index
    %45 = vector.load %arg2[%c3, %c0_24, %c0_25] : memref<9x4x4xf32, #tpu.memory_space<vmem>>, vector<1x4x4xf32>
    %46 = vector.shape_cast %45 : vector<1x4x4xf32> to vector<4x4xf32>
    %cst_26 = arith.constant dense<0.000000e+00> : vector<4x256xf32>
    %47 = tpu.matmul %46, %44, %cst_26 {dimension_numbers = #tpu.dot_dimension_numbers<[1], [0], [0], [1], [0, 0, 1, 1], [], []>} : vector<4x4xf32>, vector<4x256xf32>, vector<4x256xf32> -> vector<4x256xf32>
    %48 = arith.addf %39, %47 : vector<4x256xf32>
    %c4 = arith.constant 4 : index
    %c0_27 = arith.constant 0 : index
    %c0_28 = arith.constant 0 : index
    %49 = vector.load %arg2[%c4, %c0_27, %c0_28] : memref<9x4x4xf32, #tpu.memory_space<vmem>>, vector<1x4x4xf32>
    %50 = vector.shape_cast %49 : vector<1x4x4xf32> to vector<4x4xf32>
    %cst_29 = arith.constant dense<0.000000e+00> : vector<4x256xf32>
    %51 = tpu.matmul %50, %1, %cst_29 {dimension_numbers = #tpu.dot_dimension_numbers<[1], [0], [0], [1], [0, 0, 1, 1], [], []>} : vector<4x4xf32>, vector<4x256xf32>, vector<4x256xf32> -> vector<4x256xf32>
    %52 = arith.addf %48, %51 : vector<4x256xf32>
    %c255_i32 = arith.constant 255 : i32
    %53 = tpu.dynamic_rotate %1 by %c255_i32 dim 1 : vector<4x256xf32>, i32 -> vector<4x256xf32>
    %c15_i32_30 = arith.constant 15 : i32
    %54 = vector.broadcast %c15_i32_30 : i32 to vector<4x256xi32>
    %55 = arith.cmpi slt, %5, %54 : vector<4x256xi32>
    %cst_31 = arith.constant 0.000000e+00 : f32
    %56 = vector.broadcast %cst_31 : f32 to vector<4x256xf32>
    %57 = arith.select %55, %53, %56 : vector<4x256xi1>, vector<4x256xf32>
    %c5 = arith.constant 5 : index
    %c0_32 = arith.constant 0 : index
    %c0_33 = arith.constant 0 : index
    %58 = vector.load %arg2[%c5, %c0_32, %c0_33] : memref<9x4x4xf32, #tpu.memory_space<vmem>>, vector<1x4x4xf32>
    %59 = vector.shape_cast %58 : vector<1x4x4xf32> to vector<4x4xf32>
    %cst_34 = arith.constant dense<0.000000e+00> : vector<4x256xf32>
    %60 = tpu.matmul %59, %57, %cst_34 {dimension_numbers = #tpu.dot_dimension_numbers<[1], [0], [0], [1], [0, 0, 1, 1], [], []>} : vector<4x4xf32>, vector<4x256xf32>, vector<4x256xf32> -> vector<4x256xf32>
    %61 = arith.addf %52, %60 : vector<4x256xf32>
    %c241_i32 = arith.constant 241 : i32
    %62 = tpu.dynamic_rotate %1 by %c241_i32 dim 1 : vector<4x256xf32>, i32 -> vector<4x256xf32>
    %c240_i32 = arith.constant 240 : i32
    %63 = vector.broadcast %c240_i32 : i32 to vector<4x256xi32>
    %64 = arith.cmpi slt, %2, %63 : vector<4x256xi32>
    %c1_i32_35 = arith.constant 1 : i32
    %65 = vector.broadcast %c1_i32_35 : i32 to vector<4x256xi32>
    %66 = arith.cmpi sge, %5, %65 : vector<4x256xi32>
    %67 = arith.andi %64, %66 : vector<4x256xi1>
    %cst_36 = arith.constant 0.000000e+00 : f32
    %68 = vector.broadcast %cst_36 : f32 to vector<4x256xf32>
    %69 = arith.select %67, %62, %68 : vector<4x256xi1>, vector<4x256xf32>
    %c6 = arith.constant 6 : index
    %c0_37 = arith.constant 0 : index
    %c0_38 = arith.constant 0 : index
    %70 = vector.load %arg2[%c6, %c0_37, %c0_38] : memref<9x4x4xf32, #tpu.memory_space<vmem>>, vector<1x4x4xf32>
    %71 = vector.shape_cast %70 : vector<1x4x4xf32> to vector<4x4xf32>
    %cst_39 = arith.constant dense<0.000000e+00> : vector<4x256xf32>
    %72 = tpu.matmul %71, %69, %cst_39 {dimension_numbers = #tpu.dot_dimension_numbers<[1], [0], [0], [1], [0, 0, 1, 1], [], []>} : vector<4x4xf32>, vector<4x256xf32>, vector<4x256xf32> -> vector<4x256xf32>
    %73 = arith.addf %61, %72 : vector<4x256xf32>
    %c240_i32_40 = arith.constant 240 : i32
    %74 = tpu.dynamic_rotate %1 by %c240_i32_40 dim 1 : vector<4x256xf32>, i32 -> vector<4x256xf32>
    %c240_i32_41 = arith.constant 240 : i32
    %75 = vector.broadcast %c240_i32_41 : i32 to vector<4x256xi32>
    %76 = arith.cmpi slt, %2, %75 : vector<4x256xi32>
    %cst_42 = arith.constant 0.000000e+00 : f32
    %77 = vector.broadcast %cst_42 : f32 to vector<4x256xf32>
    %78 = arith.select %76, %74, %77 : vector<4x256xi1>, vector<4x256xf32>
    %c7 = arith.constant 7 : index
    %c0_43 = arith.constant 0 : index
    %c0_44 = arith.constant 0 : index
    %79 = vector.load %arg2[%c7, %c0_43, %c0_44] : memref<9x4x4xf32, #tpu.memory_space<vmem>>, vector<1x4x4xf32>
    %80 = vector.shape_cast %79 : vector<1x4x4xf32> to vector<4x4xf32>
    %cst_45 = arith.constant dense<0.000000e+00> : vector<4x256xf32>
    %81 = tpu.matmul %80, %78, %cst_45 {dimension_numbers = #tpu.dot_dimension_numbers<[1], [0], [0], [1], [0, 0, 1, 1], [], []>} : vector<4x4xf32>, vector<4x256xf32>, vector<4x256xf32> -> vector<4x256xf32>
    %82 = arith.addf %73, %81 : vector<4x256xf32>
    %c239_i32 = arith.constant 239 : i32
    %83 = tpu.dynamic_rotate %1 by %c239_i32 dim 1 : vector<4x256xf32>, i32 -> vector<4x256xf32>
    %c240_i32_46 = arith.constant 240 : i32
    %84 = vector.broadcast %c240_i32_46 : i32 to vector<4x256xi32>
    %85 = arith.cmpi slt, %2, %84 : vector<4x256xi32>
    %c15_i32_47 = arith.constant 15 : i32
    %86 = vector.broadcast %c15_i32_47 : i32 to vector<4x256xi32>
    %87 = arith.cmpi slt, %5, %86 : vector<4x256xi32>
    %88 = arith.andi %85, %87 : vector<4x256xi1>
    %cst_48 = arith.constant 0.000000e+00 : f32
    %89 = vector.broadcast %cst_48 : f32 to vector<4x256xf32>
    %90 = arith.select %88, %83, %89 : vector<4x256xi1>, vector<4x256xf32>
    %c8 = arith.constant 8 : index
    %c0_49 = arith.constant 0 : index
    %c0_50 = arith.constant 0 : index
    %91 = vector.load %arg2[%c8, %c0_49, %c0_50] : memref<9x4x4xf32, #tpu.memory_space<vmem>>, vector<1x4x4xf32>
    %92 = vector.shape_cast %91 : vector<1x4x4xf32> to vector<4x4xf32>
    %cst_51 = arith.constant dense<0.000000e+00> : vector<4x256xf32>
    %93 = tpu.matmul %92, %90, %cst_51 {dimension_numbers = #tpu.dot_dimension_numbers<[1], [0], [0], [1], [0, 0, 1, 1], [], []>} : vector<4x4xf32>, vector<4x256xf32>, vector<4x256xf32> -> vector<4x256xf32>
    %94 = arith.addf %82, %93 : vector<4x256xf32>
    %c0_52 = arith.constant 0 : index
    %c0_53 = arith.constant 0 : index
    %95 = vector.load %arg3[%c0_52, %c0_53] : memref<4x1xf32, #tpu.memory_space<vmem>>, vector<4x1xf32>
    %96 = vector.broadcast %95 : vector<4x1xf32> to vector<4x256xf32>
    %97 = arith.addf %94, %96 : vector<4x256xf32>
    %cst_54 = arith.constant 0.000000e+00 : f32
    %98 = vector.broadcast %cst_54 : f32 to vector<4x256xf32>
    %99 = arith.maximumf %97, %98 : vector<4x256xf32>
    %c0_55 = arith.constant 0 : index
    %c0_56 = arith.constant 0 : index
    %100 = vector.load %arg4[%c0_55, %c0_56] : memref<8x4xf32, #tpu.memory_space<vmem>>, vector<8x4xf32>
    %cst_57 = arith.constant dense<0.000000e+00> : vector<8x256xf32>
    %101 = tpu.matmul %100, %99, %cst_57 {dimension_numbers = #tpu.dot_dimension_numbers<[1], [0], [0], [1], [0, 0, 1, 1], [], []>} : vector<8x4xf32>, vector<4x256xf32>, vector<8x256xf32> -> vector<8x256xf32>
    %c0_58 = arith.constant 0 : index
    %c0_59 = arith.constant 0 : index
    %102 = vector.load %arg5[%c0_58, %c0_59] : memref<8x1xf32, #tpu.memory_space<vmem>>, vector<8x1xf32>
    %103 = vector.broadcast %102 : vector<8x1xf32> to vector<8x256xf32>
    %104 = arith.addf %101, %103 : vector<8x256xf32>
    %c0_60 = arith.constant 0 : index
    %c0_61 = arith.constant 0 : index
    %c0_62 = arith.constant 0 : index
    %105 = vector.load %arg7[%c0_60, %c0_61, %c0_62] : memref<1x8x256xf32, #tpu.memory_space<vmem>>, vector<1x8x256xf32>
    %106 = vector.shape_cast %105 : vector<1x8x256xf32> to vector<8x256xf32>
    %107 = vector.shape_cast %104 : vector<8x256xf32> to vector<1x8x256xf32>
    tpu.vector_store %arg7[%c0_60, %c0_61, %c0_62], %107 {strides = array<i32>} : memref<1x8x256xf32, #tpu.memory_space<vmem>>, vector<1x8x256xf32>,
    return
  }
  func.func @transform_0(%arg0: i32) -> (i32, i32, i32) {
    %c0_i32 = arith.constant 0 : i32
    %c0_i32_0 = arith.constant 0 : i32
    %c0_i32_1 = arith.constant 0 : i32
    return %arg0, %c0_i32, %c0_i32_0 : i32, i32, i32
  }
  func.func @transform_1(%arg0: i32) -> (i32, i32, i32) {
    %c0_i32 = arith.constant 0 : i32
    %c0_i32_0 = arith.constant 0 : i32
    %c0_i32_1 = arith.constant 0 : i32
    %c0_i32_2 = arith.constant 0 : i32
    return %c0_i32, %c0_i32_0, %c0_i32_1 : i32, i32, i32
  }
  func.func @transform_2(%arg0: i32) -> (i32, i32) {
    %c0_i32 = arith.constant 0 : i32
    %c0_i32_0 = arith.constant 0 : i32
    %c0_i32_1 = arith.constant 0 : i32
    return %c0_i32, %c0_i32_0 : i32, i32
  }
  func.func @transform_3(%arg0: i32) -> (i32, i32) {
    %c0_i32 = arith.constant 0 : i32
    %c0_i32_0 = arith.constant 0 : i32
    %c0_i32_1 = arith.constant 0 : i32
    return %c0_i32, %c0_i32_0 : i32, i32
  }
  func.func @transform_4(%arg0: i32) -> (i32, i32) {
    %c0_i32 = arith.constant 0 : i32
    %c0_i32_0 = arith.constant 0 : i32
    %c0_i32_1 = arith.constant 0 : i32
    return %c0_i32, %c0_i32_0 : i32, i32
  }
  func.func @transform_5(%arg0: i32) -> (i32, i32) {
    %c0_i32 = arith.constant 0 : i32
    %c0_i32_0 = arith.constant 0 : i32
    %c0_i32_1 = arith.constant 0 : i32
    return %c0_i32, %c0_i32_0 : i32, i32
  }
  func.func @transform_6(%arg0: i32) -> (i32, i32, i32) {
    %c0_i32 = arith.constant 0 : i32
    %c0_i32_0 = arith.constant 0 : i32
    %c0_i32_1 = arith.constant 0 : i32
    return %arg0, %c0_i32, %c0_i32_0 : i32, i32, i32
  }
}

</mosaic_0001>

<llo_original>
// kernel: head_forward.1
$region0: #{head_forward.1}
  #allocation0 [shape = 'u32[]', space=smem, size = 0x4, offset = 0x4, fixed_abs, tag = 'smem constant byte address 0x4 - core index']
  #allocation1 [shape = 'u32[144,128]{1,0:T(1,128)}', space=vmem, size = 0x12000, scoped, tag = 'internal scratch']
  %s0 = inlined_call_operand.vmem [shape: f32[2,4,256], index: 0, kind: input, shape index: {}]
  %s1 = inlined_call_operand.vmem [shape: f32[9,4,4], index: 1, kind: input, shape index: {}]
  %s2 = inlined_call_operand.vmem [shape: f32[4,1], index: 2, kind: input, shape index: {}]
  %s3 = inlined_call_operand.vmem [shape: f32[8,4], index: 3, kind: input, shape index: {}]
  %s4 = inlined_call_operand.vmem [shape: f32[8,1], index: 4, kind: input, shape index: {}]
  %s5 = inlined_call_operand.vmem [shape: s32[1,256], index: 5, kind: input, shape index: {}]
  %s6 = inlined_call_operand.vmem [shape: f32[2,8,256], index: 6, kind: output, shape index: {}]
  %s7 = sld [smem:[#allocation0]]
  $region57: #{head_forward.1} parent=0
    _
  %s9 = ssub.s32 1, %s7
  %s10 = scalar_select 0, %s9, %s7
  loop: start=0, step=1, limit=4
  $region2: #{head_forward.1} parent=0 // loop_pre_header
    _
  $region3: #{head_forward.1} parent=0 // loop_header
    %s12 = sphi 0, %s16
    %p13 = scmp.ge.s32.totalorder %s12, 4
    %s22 = sphi 0, %s24
    %s25 = sphi 0, %s22
    %s26 = sphi 0, %s25
    %s42 = sphi 0, %s26
    %s46 = sphi 0, %s46
    %s48 = sphi 0, %s46
    %s49 = sphi 0, %s48
    %s63 = sphi 0, %s49
    %s67 = sphi 0, %s67
    %s69 = sphi 0, %s67
    %s70 = sphi 0, %s69
    %s84 = sphi 0, %s70
    %s88 = sphi 0, %s88
    %s90 = sphi 0, %s88
    %s91 = sphi 0, %s90
    %s105 = sphi 0, %s91
    %s109 = sphi 0, %s109
    %s111 = sphi 0, %s109
    %s112 = sphi 0, %s111
    %s126 = sphi 0, %s112
    %s130 = sphi 0, %s130
    %s132 = sphi 0, %s130
    %s133 = sphi 0, %s132
    %s147 = sphi 0, %s133
    %s153 = sphi 0, %s155
    %s156 = sphi 0, %s153
    %s157 = sphi 0, %s156
    %s173 = sphi 0, %s157
  $region4: #{head_forward.1} parent=0 // loop_header_branch
    %15 = sbr.rel (%p13) target = $region8
  $region5: #{head_forward.1} parent=0 // loop_body
    %s17 = ssub.s32 %s12, 1
    %s18 = ssub.s32 %s12, 2
    %s19 = sadd.s32 %s12, 1
    %s20 = ssub.s32 %s12, %s19
    %p21 = scmp.eq.s32.totalorder %s20, 0
    %s23 = sadd.s32 %s22, 1
    %s24 = scalar_select %p21, %s22, %s23
    %p27 = pneg %p21
    %p28 = scmp.eq.s32.totalorder %s12, 1
    %p29 = por %p27, %p28
    %p30 = scmp.ne.s32.totalorder %s22, %s25
    %p31 = scmp.eq.s32.totalorder %s12, 0
    %p32 = por %p30, %p31
    %p33 = scmp.ne.s32.totalorder %s22, %s25
    %p34 = scmp.eq.s32.totalorder %s17, 1
    %p35 = por %p33, %p34
    %p36 = scmp.ne.s32.totalorder %s25, %s26
    %p37 = scmp.eq.s32.totalorder %s17, 0
    %p38 = por %p36, %p37
    %p39 = scmp.ne.s32.totalorder %s25, %s26
    %p40 = scmp.eq.s32.totalorder %s18, 1
    %p41 = por %p39, %p40
    %p43 = scmp.ne.s32.totalorder %s26, %s42
    %p44 = scmp.eq.s32.totalorder %s18, 0
    %p45 = por %p43, %p44
    %s47 = sadd.s32 %s46, 1
    %p50 = scmp.eq.s32.totalorder %s12, 1
    %p51 = scmp.ne.s32.totalorder %s46, %s48
    %p52 = scmp.eq.s32.totalorder %s12, 0
    %p53 = por %p51, %p52
    %p54 = scmp.ne.s32.totalorder %s46, %s48
    %p55 = scmp.eq.s32.totalorder %s17, 1
    %p56 = por %p54, %p55
    %p57 = scmp.ne.s32.totalorder %s48, %s49
    %p58 = scmp.eq.s32.totalorder %s17, 0
    %p59 = por %p57, %p58
    %p60 = scmp.ne.s32.totalorder %s48, %s49
    %p61 = scmp.eq.s32.totalorder %s18, 1
    %p62 = por %p60, %p61
    %p64 = scmp.ne.s32.totalorder %s49, %s63
    %p65 = scmp.eq.s32.totalorder %s18, 0
    %p66 = por %p64, %p65
    %s68 = sadd.s32 %s67, 1
    %p71 = scmp.eq.s32.totalorder %s12, 1
    %p72 = scmp.ne.s32.totalorder %s67, %s69
    %p73 = scmp.eq.s32.totalorder %s12, 0
    %p74 = por %p72, %p73
    %p75 = scmp.ne.s32.totalorder %s67, %s69
    %p76 = scmp.eq.s32.totalorder %s17, 1
    %p77 = por %p75, %p76
    %p78 = scmp.ne.s32.totalorder %s69, %s70
    %p79 = scmp.eq.s32.totalorder %s17, 0
    %p80 = por %p78, %p79
    %p81 = scmp.ne.s32.totalorder %s69, %s70
    %p82 = scmp.eq.s32.totalorder %s18, 1
    %p83 = por %p81, %p82
    %p85 = scmp.ne.s32.totalorder %s70, %s84
    %p86 = scmp.eq.s32.totalorder %s18, 0
    %p87 = por %p85, %p86
    %s89 = sadd.s32 %s88, 1
    %p92 = scmp.eq.s32.totalorder %s12, 1
    %p93 = scmp.ne.s32.totalorder %s88, %s90
    %p94 = scmp.eq.s32.totalorder %s12, 0
    %p95 = por %p93, %p94
    %p96 = scmp.ne.s32.totalorder %s88, %s90
    %p97 = scmp.eq.s32.totalorder %s17, 1
    %p98 = por %p96, %p97
    %p99 = scmp.ne.s32.totalorder %s90, %s91
    %p100 = scmp.eq.s32.totalorder %s17, 0
    %p101 = por %p99, %p100
    %p102 = scmp.ne.s32.totalorder %s90, %s91
    %p103 = scmp.eq.s32.totalorder %s18, 1
    %p104 = por %p102, %p103
    %p106 = scmp.ne.s32.totalorder %s91, %s105
    %p107 = scmp.eq.s32.totalorder %s18, 0
    %p108 = por %p106, %p107
    %s110 = sadd.s32 %s109, 1
    %p113 = scmp.eq.s32.totalorder %s12, 1
    %p114 = scmp.ne.s32.totalorder %s109, %s111
    %p115 = scmp.eq.s32.totalorder %s12, 0
    %p116 = por %p114, %p115
    %p117 = scmp.ne.s32.totalorder %s109, %s111
    %p118 = scmp.eq.s32.totalorder %s17, 1
    %p119 = por %p117, %p118
    %p120 = scmp.ne.s32.totalorder %s111, %s112
    %p121 = scmp.eq.s32.totalorder %s17, 0
    %p122 = por %p120, %p121
    %p123 = scmp.ne.s32.totalorder %s111, %s112
    %p124 = scmp.eq.s32.totalorder %s18, 1
    %p125 = por %p123, %p124
    %p127 = scmp.ne.s32.totalorder %s112, %s126
    %p128 = scmp.eq.s32.totalorder %s18, 0
    %p129 = por %p127, %p128
    %s131 = sadd.s32 %s130, 1
    %p134 = scmp.eq.s32.totalorder %s12, 1
    %p135 = scmp.ne.s32.totalorder %s130, %s132
    %p136 = scmp.eq.s32.totalorder %s12, 0
    %p137 = por %p135, %p136
    %p138 = scmp.ne.s32.totalorder %s130, %s132
    %p139 = scmp.eq.s32.totalorder %s17, 1
    %p140 = por %p138, %p139
    %p141 = scmp.ne.s32.totalorder %s132, %s133
    %p142 = scmp.eq.s32.totalorder %s17, 0
    %p143 = por %p141, %p142
    %p144 = scmp.ne.s32.totalorder %s132, %s133
    %p145 = scmp.eq.s32.totalorder %s18, 1
    %p146 = por %p144, %p145
    %p148 = scmp.ne.s32.totalorder %s133, %s147
    %p149 = scmp.eq.s32.totalorder %s18, 0
    %p150 = por %p148, %p149
    %s151 = ssub.s32 %s12, %s19
    %p152 = scmp.eq.s32.totalorder %s151, 0
    %s154 = sadd.s32 %s153, 1
    %s155 = scalar_select %p152, %s153, %s154
    %p158 = pneg %p152
    %p159 = scmp.eq.s32.totalorder %s12, 1
    %p160 = por %p158, %p159
    %p161 = scmp.ne.s32.totalorder %s153, %s156
    %p162 = scmp.eq.s32.totalorder %s12, 0
    %p163 = por %p161, %p162
    %p164 = scmp.ne.s32.totalorder %s153, %s156
    %p165 = scmp.eq.s32.totalorder %s17, 1
    %p166 = por %p164, %p165
    %p167 = scmp.ne.s32.totalorder %s156, %s157
    %p168 = scmp.eq.s32.totalorder %s17, 0
    %p169 = por %p167, %p168
    %p170 = scmp.ne.s32.totalorder %s156, %s157
    %p171 = scmp.eq.s32.totalorder %s18, 1
    %p172 = por %p170, %p171
    %p174 = scmp.ne.s32.totalorder %s157, %s173
    %p175 = scmp.eq.s32.totalorder %s18, 0
    %p176 = por %p174, %p175
    %p177 = scmp.le.s32.totalorder 1, %s12
    %p178 = scmp.lt.s32.totalorder %s12, 3
    %p179 = pnand %p177, %p178
    %p180 = pneg %p179
    // Predicated region
    $region9: #{head_forward.1} parent=5 // pred_check
      _
    $region10: #{head_forward.1} parent=5 // pred_check_branch
      %182 = sbr.rel (%p179) target = $region12
    $region11: #{head_forward.1} parent=5 // pred_region
      %s183 = ssub.s32 %s12, 1
      // Predicated region
      $region13: #{head_forward.1} parent=11 // pred_check
        %p184 = pneg %p59
      $region14: #{head_forward.1} parent=11 // pred_check_branch
        %186 = sbr.rel (%p184) target = $region16
      $region15: #{head_forward.1} parent=11 // pred_region
        _
      $region16: #{head_forward.1} parent=11 // pred_fallthru
        _
      // Predicated region
      $region17: #{head_forward.1} parent=11 // pred_check
        %p187 = pneg %p80
      $region18: #{head_forward.1} parent=11 // pred_check_branch
        %189 = sbr.rel (%p187) target = $region20
      $region19: #{head_forward.1} parent=11 // pred_region
        _
      $region20: #{head_forward.1} parent=11 // pred_fallthru
        _
      // Predicated region
      $region21: #{head_forward.1} parent=11 // pred_check
        %p190 = pneg %p101
      $region22: #{head_forward.1} parent=11 // pred_check_branch
        %192 = sbr.rel (%p190) target = $region24
      $region23: #{head_forward.1} parent=11 // pred_region
        _
      $region24: #{head_forward.1} parent=11 // pred_fallthru
        _
      // Predicated region
      $region25: #{head_forward.1} parent=11 // pred_check
        %p193 = pneg %p122
      $region26: #{head_forward.1} parent=11 // pred_check_branch
        %195 = sbr.rel (%p193) target = $region28
      $region27: #{head_forward.1} parent=11 // pred_region
        _
      $region28: #{head_forward.1} parent=11 // pred_fallthru
        _
      // Predicated region
      $region29: #{head_forward.1} parent=11 // pred_check
        %p196 = pneg %p143
      $region30: #{head_forward.1} parent=11 // pred_check_branch
        %198 = sbr.rel (%p196) target = $region32
      $region31: #{head_forward.1} parent=11 // pred_region
        _
      $region32: #{head_forward.1} parent=11 // pred_fallthru
        _
    $region12: #{head_forward.1} parent=5 // pred_fallthru
      _
    %p199 = scmp.lt.s32.totalorder %s12, 2
    // Predicated region
    $region33: #{head_forward.1} parent=5 // pred_check
      %p200 = pneg %p199
    $region34: #{head_forward.1} parent=5 // pred_check_branch
      %202 = sbr.rel (%p200) target = $region36
    $region35: #{head_forward.1} parent=5 // pred_region
      // Predicated region
      $region37: #{head_forward.1} parent=35 // pred_check
        %p203 = pneg %p32
      $region38: #{head_forward.1} parent=35 // pred_check_branch
        %205 = sbr.rel (%p203) target = $region40
      $region39: #{head_forward.1} parent=35 // pred_region
        %p206 = scmp.lt.s32.totalorder %s12, 1
        %s207 = scalar_select %p206, %s12, 1
        %s208 = smul.addr %s207, 2
        %s209 = smul.addr %s208, 4
        %s210 = scalar_lea.vmem %s0, %s209
      $region40: #{head_forward.1} parent=35 // pred_fallthru
        _
    $region36: #{head_forward.1} parent=5 // pred_fallthru
      _
    %p211 = scmp.le.s32.totalorder 1, %s12
    %p212 = scmp.lt.s32.totalorder %s12, 3
    %p213 = pnand %p211, %p212
    %p214 = pneg %p213
    // Predicated region
    $region41: #{head_forward.1} parent=5 // pred_check
      _
    $region42: #{head_forward.1} parent=5 // pred_check_branch
      %216 = sbr.rel (%p213) target = $region44
    $region43: #{head_forward.1} parent=5 // pred_region
      %s217 = ssub.s32 %s12, 1
      %p218 = scmp.lt.s32.totalorder %s17, 1
      %s219 = scalar_select %p218, %s17, 1
      %s220 = smul.addr %s219, 2
      %s221 = smul.addr %s220, 4
      %s222 = scalar_lea.vmem %s0, %s221
      %p223 = pneg %p38
      %p224 = pneg %p35
      %p225 = pneg %p59
      %p226 = pneg %p56
      %p227 = pneg %p80
      %p228 = pneg %p77
      %p229 = pneg %p101
      %p230 = pneg %p98
      %p231 = pneg %p122
      %p232 = pneg %p119
      %p233 = pneg %p143
      %p234 = pneg %p140
      %p235 = pneg %p169
      %p236 = pneg %p166
      %p237 = scmp.lt.s32.totalorder %s17, 1
      %s238 = scalar_select %p237, %s17, 1
      %s239 = smul.addr %s238, 2
      %s240 = smul.addr %s239, 8
      %s241 = scalar_lea.vmem %s6, %s240
      %p242 = scmp.lt.s32.totalorder %s17, 1
      %s243 = scalar_select %p242, %s17, 1
      %s244 = smul.addr %s243, 2
      %s245 = smul.addr %s244, 4
      %s246 = scalar_lea.vmem %s0, %s245
      %p247 = scmp.lt.s32.totalorder %s17, 1
      %s248 = scalar_select %p247, %s17, 1
      %s249 = smul.addr %s248, 2
      %s250 = smul.addr %s249, 8
      %s251 = scalar_lea.vmem %s6, %s250
      %v252 = vld [vmem:[%s246] sm:$0xff]
      %v253 = vlaneseq
      %v254 = vand.u32 %v253, 127
      %v255 = vadd.s32 %v254, 128
      %v256 = vld [vmem:[%s5] sm:$0x3]
      %v257 = vlaneseq
      %v258 = vshrl.u32 %v257, 7
      %v259 = vsub.s32 0, %v258
      %v260 = vrot.slane %v256, %v259
      %v261 = vlaneseq
      %v262 = vshrl.u32 %v261, 7
      %v263 = vsub.s32 1, %v262
      %v264 = vrot.slane %v256, %v263
      %v266 = vcombine.high %v252, %v252
      %268 = vrot.lane.b32.xlu0 %v252, 17
      %v269 = vpop.permute.xlu0 %268
      %270 = vrot.lane.b32.xlu0 %v266, 17
      %v271 = vpop.permute.xlu0 %270
      %vm272 = vcmp.lt.s32.totalorder %v254, 17
      %v273 = vsel %vm272, %v269, %v271
      %v274 = vsel %vm272, %v271, %v269
      %vm275 = vcmp.ge.s32.totalorder %v254, 16
      %vm276 = vcmp.ge.s32.totalorder %v255, 16
      %vm277 = vcmp.ge.s32.totalorder %v260, 1
      %vm278 = vcmp.ge.s32.totalorder %v264, 1
      %vm279 = vmand %vm275, %vm277
      %vm280 = vmand %vm276, %vm278
      %v281 = vsel %vm279, %v274, 0.0
      %v282 = vsel %vm280, %v273, 0.0
      %v283 = vld [vmem:[%s1] sm:$0xf]
      %284 = vrot.lane.b32.xlu0 %v252, 16
      %v285 = vpop.permute.xlu0 %284
      %286 = vrot.lane.b32.xlu0 %v266, 16
      %v287 = vpop.permute.xlu0 %286
      %vm288 = vcmp.lt.s32.totalorder %v254, 16
      %v289 = vsel %vm288, %v285, %v287
      %v290 = vsel %vm288, %v287, %v285
      %v291 = vsel %vm275, %v290, 0.0
      %v292 = vsel %vm276, %v289, 0.0
      %s293 = scalar_lea.vmem %s1, 4
      %v294 = vld [vmem:[%s293] sm:$0xf]
      %vm295 = vcmask 31744
      %v297 = vsel %vm295, %v294, 0
      %vm299 = vcmask 1043456
      %v301 = vsel %vm299, %v291, 0
      %v304 = vsel %vm299, %v292, 0
      %306 = vmatprep.subr.mxu0 %v304
      %307 = vmatpush1.msra.mxu0 %v301
      %308 = vmatprep.subr.mxu0 0.0
      %309 = vmatpush1.msra.mxu0 0.0
      %310 = vmatprep.subr.mxu0 0.0
      %311 = vmatpush1.msra.mxu0 0.0
      %312 = vmatprep.subr.mxu0 0.0
      %313 = vmatpush1.msra.mxu0 0.0
      %314 = vmatprep.subr.mxu0 0.0
      %315 = vmatpush1.msra.mxu0 0.0
      %316 = vmatprep.subr.mxu0 0.0
      %317 = vmatpush1.msra.mxu0 0.0
      %318 = vmatprep.subr.mxu0 0.0
      %319 = vmatpush1.msra.mxu0 0.0
      %320 = vmatprep.subr.mxu0 0.0
      %321 = vmatpush1.msra.mxu0 0.0
      %322 = vmatprep.subr.mxu0 0.0
      %323 = vmatpush1.msra.mxu0 0.0
      %324 = vmatprep.subr.mxu0 0.0
      %325 = vmatpush1.msra.mxu0 0.0
      %326 = vmatprep.subr.mxu0 0.0
      %327 = vmatpush1.msra.mxu0 0.0
      %328 = vmatprep.subr.mxu0 0.0
      %329 = vmatpush1.msra.mxu0 0.0
      %330 = vmatprep.subr.mxu0 0.0
      %331 = vmatpush1.msra.mxu0 0.0
      %332 = vmatprep.subr.mxu0 0.0
      %333 = vmatpush1.msra.mxu0 0.0
      %334 = vmatprep.subr.mxu0 0.0
      %335 = vmatpush1.msra.mxu0 0.0
      %336 = vmatprep.subr.mxu0 0.0
      %337 = vmatpush1.msra.mxu0 0.0
      %338 = vmatprep.subr.mxu0 0.0
      %339 = vmatpush1.msra.mxu0 0.0
      %340 = vmatprep.subr.mxu0 0.0
      %341 = vmatpush1.msra.mxu0 0.0
      %342 = vmatprep.subr.mxu0 0.0
      %343 = vmatpush1.msra.mxu0 0.0
      %344 = vmatprep.subr.mxu0 0.0
      %345 = vmatpush1.msra.mxu0 0.0
      %346 = vmatprep.subr.mxu0 0.0
      %347 = vmatpush1.msra.mxu0 0.0
      %348 = vmatprep.subr.mxu0 0.0
      %349 = vmatpush1.msra.mxu0 0.0
      %350 = vmatprep.subr.mxu0 0.0
      %351 = vmatpush1.msra.mxu0 0.0
      %352 = vmatprep.subr.mxu0 0.0
      %353 = vmatpush1.msra.mxu0 0.0
      %354 = vmatprep.subr.mxu0 0.0
      %355 = vmatpush1.msra.mxu0 0.0
      %356 = vmatprep.subr.mxu0 0.0
      %357 = vmatpush1.msra.mxu0 0.0
      %358 = vmatprep.subr.mxu0 0.0
      %359 = vmatpush1.msra.mxu0 0.0
      %360 = vmatprep.subr.mxu0 0.0
      %361 = vmatpush1.msra.mxu0 0.0
      %362 = vmatprep.subr.mxu0 0.0
      %363 = vmatpush1.msra.mxu0 0.0
      %364 = vmatprep.subr.mxu0 0.0
      %365 = vmatpush1.msra.mxu0 0.0
      %366 = vmatprep.subr.mxu0 0.0
      %367 = vmatpush1.msra.mxu0 0.0
      %368 = vmatprep.subr.mxu0 0.0
      %369 = vmatpush1.msra.mxu0 0.0
      %370 = vmatprep.mubr.f32.mxu0 0.0
      %371 = vmatmul.mubr.f32.gmra.mrb[0].mxu0 %v297
      %v372 = vpop.f32.mrb[0].mxu0
      %v373 = vadd.f32 0.0, %v372
      %v374 = vpop.f32.mrb[0].mxu0
      %v375 = vadd.f32 0.0, %v374
      %376 = vdwg.mxu0
      %v378 = vsel %vm295, %v283, 0
      %v381 = vsel %vm299, %v281, 0
      %v384 = vsel %vm299, %v282, 0
      %386 = vmatprep.subr.mxu0 %v384
      %387 = vmatpush1.msra.mxu0 %v381
      %388 = vmatprep.subr.mxu0 0.0
      %389 = vmatpush1.msra.mxu0 0.0
      %390 = vmatprep.subr.mxu0 0.0
      %391 = vmatpush1.msra.mxu0 0.0
      %392 = vmatprep.subr.mxu0 0.0
      %393 = vmatpush1.msra.mxu0 0.0
      %394 = vmatprep.subr.mxu0 0.0
      %395 = vmatpush1.msra.mxu0 0.0
      %396 = vmatprep.subr.mxu0 0.0
      %397 = vmatpush1.msra.mxu0 0.0
      %398 = vmatprep.subr.mxu0 0.0
      %399 = vmatpush1.msra.mxu0 0.0
      %400 = vmatprep.subr.mxu0 0.0
      %401 = vmatpush1.msra.mxu0 0.0
      %402 = vmatprep.subr.mxu0 0.0
      %403 = vmatpush1.msra.mxu0 0.0
      %404 = vmatprep.subr.mxu0 0.0
      %405 = vmatpush1.msra.mxu0 0.0
      %406 = vmatprep.subr.mxu0 0.0
      %407 = vmatpush1.msra.mxu0 0.0
      %408 = vmatprep.subr.mxu0 0.0
      %409 = vmatpush1.msra.mxu0 0.0
      %410 = vmatprep.subr.mxu0 0.0
      %411 = vmatpush1.msra.mxu0 0.0
      %412 = vmatprep.subr.mxu0 0.0
      %413 = vmatpush1.msra.mxu0 0.0
      %414 = vmatprep.subr.mxu0 0.0
      %415 = vmatpush1.msra.mxu0 0.0
      %416 = vmatprep.subr.mxu0 0.0
      %417 = vmatpush1.msra.mxu0 0.0
      %418 = vmatprep.subr.mxu0 0.0
      %419 = vmatpush1.msra.mxu0 0.0
      %420 = vmatprep.subr.mxu0 0.0
      %421 = vmatpush1.msra.mxu0 0.0
      %422 = vmatprep.subr.mxu0 0.0
      %423 = vmatpush1.msra.mxu0 0.0
      %424 = vmatprep.subr.mxu0 0.0
      %425 = vmatpush1.msra.mxu0 0.0
      %426 = vmatprep.subr.mxu0 0.0
      %427 = vmatpush1.msra.mxu0 0.0
      %428 = vmatprep.subr.mxu0 0.0
      %429 = vmatpush1.msra.mxu0 0.0
      %430 = vmatprep.subr.mxu0 0.0
      %431 = vmatpush1.msra.mxu0 0.0
      %432 = vmatprep.subr.mxu0 0.0
      %433 = vmatpush1.msra.mxu0 0.0
      %434 = vmatprep.subr.mxu0 0.0
      %435 = vmatpush1.msra.mxu0 0.0
      %436 = vmatprep.subr.mxu0 0.0
      %437 = vmatpush1.msra.mxu0 0.0
      %438 = vmatprep.subr.mxu0 0.0
      %439 = vmatpush1.msra.mxu0 0.0
      %440 = vmatprep.subr.mxu0 0.0
      %441 = vmatpush1.msra.mxu0 0.0
      %442 = vmatprep.subr.mxu0 0.0
      %443 = vmatpush1.msra.mxu0 0.0
      %444 = vmatprep.subr.mxu0 0.0
      %445 = vmatpush1.msra.mxu0 0.0
      %446 = vmatprep.subr.mxu0 0.0
      %447 = vmatpush1.msra.mxu0 0.0
      %448 = vmatprep.subr.mxu0 0.0
      %449 = vmatpush1.msra.mxu0 0.0
      %450 = vmatprep.mubr.f32.mxu0 0.0
      %451 = vmatmul.mubr.f32.gmra.mrb[0].mxu0 %v378
      %v452 = vpop.f32.mrb[0].mxu0
      %v453 = vadd.f32 %v373, %v452
      %v454 = vpop.f32.mrb[0].mxu0
      %v455 = vadd.f32 %v375, %v454
      %456 = vdwg.mxu0
      %457 = vrot.lane.b32.xlu0 %v252, 15
      %v458 = vpop.permute.xlu0 %457
      %459 = vrot.lane.b32.xlu0 %v266, 15
      %v460 = vpop.permute.xlu0 %459
      %vm461 = vcmp.lt.s32.totalorder %v254, 15
      %v462 = vsel %vm461, %v458, %v460
      %v463 = vsel %vm461, %v460, %v458
      %vm464 = vcmp.lt.s32.totalorder %v260, 15
      %vm465 = vcmp.lt.s32.totalorder %v264, 15
      %vm466 = vmand %vm275, %vm464
      %vm467 = vmand %vm276, %vm465
      %v468 = vsel %vm466, %v463, 0.0
      %v469 = vsel %vm467, %v462, 0.0
      %s470 = scalar_lea.vmem %s1, 8
      %v471 = vld [vmem:[%s470] sm:$0xf]
      %v473 = vsel %vm295, %v471, 0
      %v476 = vsel %vm299, %v468, 0
      %v479 = vsel %vm299, %v469, 0
      %481 = vmatprep.subr.mxu0 %v479
      %482 = vmatpush1.msra.mxu0 %v476
      %483 = vmatprep.subr.mxu0 0.0
      %484 = vmatpush1.msra.mxu0 0.0
      %485 = vmatprep.subr.mxu0 0.0
      %486 = vmatpush1.msra.mxu0 0.0
      %487 = vmatprep.subr.mxu0 0.0
      %488 = vmatpush1.msra.mxu0 0.0
      %489 = vmatprep.subr.mxu0 0.0
      %490 = vmatpush1.msra.mxu0 0.0
      %491 = vmatprep.subr.mxu0 0.0
      %492 = vmatpush1.msra.mxu0 0.0
      %493 = vmatprep.subr.mxu0 0.0
      %494 = vmatpush1.msra.mxu0 0.0
      %495 = vmatprep.subr.mxu0 0.0
      %496 = vmatpush1.msra.mxu0 0.0
      %497 = vmatprep.subr.mxu0 0.0
      %498 = vmatpush1.msra.mxu0 0.0
      %499 = vmatprep.subr.mxu0 0.0
      %500 = vmatpush1.msra.mxu0 0.0
      %501 = vmatprep.subr.mxu0 0.0
      %502 = vmatpush1.msra.mxu0 0.0
      %503 = vmatprep.subr.mxu0 0.0
      %504 = vmatpush1.msra.mxu0 0.0
      %505 = vmatprep.subr.mxu0 0.0
      %506 = vmatpush1.msra.mxu0 0.0
      %507 = vmatprep.subr.mxu0 0.0
      %508 = vmatpush1.msra.mxu0 0.0
      %509 = vmatprep.subr.mxu0 0.0
      %510 = vmatpush1.msra.mxu0 0.0
      %511 = vmatprep.subr.mxu0 0.0
      %512 = vmatpush1.msra.mxu0 0.0
      %513 = vmatprep.subr.mxu0 0.0
      %514 = vmatpush1.msra.mxu0 0.0
      %515 = vmatprep.subr.mxu0 0.0
      %516 = vmatpush1.msra.mxu0 0.0
      %517 = vmatprep.subr.mxu0 0.0
      %518 = vmatpush1.msra.mxu0 0.0
      %519 = vmatprep.subr.mxu0 0.0
      %520 = vmatpush1.msra.mxu0 0.0
      %521 = vmatprep.subr.mxu0 0.0
      %522 = vmatpush1.msra.mxu0 0.0
      %523 = vmatprep.subr.mxu0 0.0
      %524 = vmatpush1.msra.mxu0 0.0
      %525 = vmatprep.subr.mxu0 0.0
      %526 = vmatpush1.msra.mxu0 0.0
      %527 = vmatprep.subr.mxu0 0.0
      %528 = vmatpush1.msra.mxu0 0.0
      %529 = vmatprep.subr.mxu0 0.0
      %530 = vmatpush1.msra.mxu0 0.0
      %531 = vmatprep.subr.mxu0 0.0
      %532 = vmatpush1.msra.mxu0 0.0
      %533 = vmatprep.subr.mxu0 0.0
      %534 = vmatpush1.msra.mxu0 0.0
      %535 = vmatprep.subr.mxu0 0.0
      %536 = vmatpush1.msra.mxu0 0.0
      %537 = vmatprep.subr.mxu0 0.0
      %538 = vmatpush1.msra.mxu0 0.0
      %539 = vmatprep.subr.mxu0 0.0
      %540 = vmatpush1.msra.mxu0 0.0
      %541 = vmatprep.subr.mxu0 0.0
      %542 = vmatpush1.msra.mxu0 0.0
      %543 = vmatprep.subr.mxu0 0.0
      %544 = vmatpush1.msra.mxu0 0.0
      %545 = vmatprep.mubr.f32.mxu0 0.0
      %546 = vmatmul.mubr.f32.gmra.mrb[0].mxu0 %v473
      %v547 = vpop.f32.mrb[0].mxu0
      %v548 = vadd.f32 0.0, %v547
      %v549 = vpop.f32.mrb[0].mxu0
      %v550 = vadd.f32 0.0, %v549
      %551 = vdwg.mxu0
      %v552 = vadd.f32 %v453, %v548
      %v553 = vadd.f32 %v455, %v550
      %554 = vrot.lane.b32.xlu0 %v252, 1
      %v555 = vpop.permute.xlu0 %554
      %556 = vrot.lane.b32.xlu0 %v266, 1
      %v557 = vpop.permute.xlu0 %556
      %vm558 = vcmp.lt.s32.totalorder %v254, 1
      %v559 = vsel %vm558, %v555, %v557
      %v560 = vsel %vm558, %v557, %v555
      %v561 = vsel %vm277, %v560, 0.0
      %v562 = vsel %vm278, %v559, 0.0
      %s563 = scalar_lea.vmem %s1, 12
      %v564 = vld [vmem:[%s563] sm:$0xf]
      %v566 = vsel %vm295, %v564, 0
      %v569 = vsel %vm299, %v561, 0
      %v572 = vsel %vm299, %v562, 0
      %574 = vmatprep.subr.mxu0 %v572
      %575 = vmatpush1.msra.mxu0 %v569
      %576 = vmatprep.subr.mxu0 0.0
      %577 = vmatpush1.msra.mxu0 0.0
      %578 = vmatprep.subr.mxu0 0.0
      %579 = vmatpush1.msra.mxu0 0.0
      %580 = vmatprep.subr.mxu0 0.0
      %581 = vmatpush1.msra.mxu0 0.0
      %582 = vmatprep.subr.mxu0 0.0
      %583 = vmatpush1.msra.mxu0 0.0
      %584 = vmatprep.subr.mxu0 0.0
      %585 = vmatpush1.msra.mxu0 0.0
      %586 = vmatprep.subr.mxu0 0.0
      %587 = vmatpush1.msra.mxu0 0.0
      %588 = vmatprep.subr.mxu0 0.0
      %589 = vmatpush1.msra.mxu0 0.0
      %590 = vmatprep.subr.mxu0 0.0
      %591 = vmatpush1.msra.mxu0 0.0
      %592 = vmatprep.subr.mxu0 0.0
      %593 = vmatpush1.msra.mxu0 0.0
      %594 = vmatprep.subr.mxu0 0.0
      %595 = vmatpush1.msra.mxu0 0.0
      %596 = vmatprep.subr.mxu0 0.0
      %597 = vmatpush1.msra.mxu0 0.0
      %598 = vmatprep.subr.mxu0 0.0
      %599 = vmatpush1.msra.mxu0 0.0
      %600 = vmatprep.subr.mxu0 0.0
      %601 = vmatpush1.msra.mxu0 0.0
      %602 = vmatprep.subr.mxu0 0.0
      %603 = vmatpush1.msra.mxu0 0.0
      %604 = vmatprep.subr.mxu0 0.0
      %605 = vmatpush1.msra.mxu0 0.0
      %606 = vmatprep.subr.mxu0 0.0
      %607 = vmatpush1.msra.mxu0 0.0
      %608 = vmatprep.subr.mxu0 0.0
      %609 = vmatpush1.msra.mxu0 0.0
      %610 = vmatprep.subr.mxu0 0.0
      %611 = vmatpush1.msra.mxu0 0.0
      %612 = vmatprep.subr.mxu0 0.0
      %613 = vmatpush1.msra.mxu0 0.0
      %614 = vmatprep.subr.mxu0 0.0
      %615 = vmatpush1.msra.mxu0 0.0
      %616 = vmatprep.subr.mxu0 0.0
      %617 = vmatpush1.msra.mxu0 0.0
      %618 = vmatprep.subr.mxu0 0.0
      %619 = vmatpush1.msra.mxu0 0.0
      %620 = vmatprep.subr.mxu0 0.0
      %621 = vmatpush1.msra.mxu0 0.0
      %622 = vmatprep.subr.mxu0 0.0
      %623 = vmatpush1.msra.mxu0 0.0
      %624 = vmatprep.subr.mxu0 0.0
      %625 = vmatpush1.msra.mxu0 0.0
      %626 = vmatprep.subr.mxu0 0.0
      %627 = vmatpush1.msra.mxu0 0.0
      %628 = vmatprep.subr.mxu0 0.0
      %629 = vmatpush1.msra.mxu0 0.0
      %630 = vmatprep.subr.mxu0 0.0
      %631 = vmatpush1.msra.mxu0 0.0
      %632 = vmatprep.subr.mxu0 0.0
      %633 = vmatpush1.msra.mxu0 0.0
      %634 = vmatprep.subr.mxu0 0.0
      %635 = vmatpush1.msra.mxu0 0.0
      %636 = vmatprep.subr.mxu0 0.0
      %637 = vmatpush1.msra.mxu0 0.0
      %638 = vmatprep.mubr.f32.mxu0 0.0
      %639 = vmatmul.mubr.f32.gmra.mrb[0].mxu0 %v566
      %v640 = vpop.f32.mrb[0].mxu0
      %v641 = vadd.f32 0.0, %v640
      %v642 = vpop.f32.mrb[0].mxu0
      %v643 = vadd.f32 0.0, %v642
      %644 = vdwg.mxu0
      %v645 = vadd.f32 %v552, %v641
      %v646 = vadd.f32 %v553, %v643
      %s647 = scalar_lea.vmem %s1, 16
      %v648 = vld [vmem:[%s647] sm:$0xf]
      %v650 = vsel %vm295, %v648, 0
      %v652 = vsel %vm299, %v252, 0
      %v654 = vsel %vm299, %v266, 0
      %656 = vmatprep.subr.mxu0 %v654
      %657 = vmatpush1.msra.mxu0 %v652
      %658 = vmatprep.subr.mxu0 0.0
      %659 = vmatpush1.msra.mxu0 0.0
      %660 = vmatprep.subr.mxu0 0.0
      %661 = vmatpush1.msra.mxu0 0.0
      %662 = vmatprep.subr.mxu0 0.0
      %663 = vmatpush1.msra.mxu0 0.0
      %664 = vmatprep.subr.mxu0 0.0
      %665 = vmatpush1.msra.mxu0 0.0
      %666 = vmatprep.subr.mxu0 0.0
      %667 = vmatpush1.msra.mxu0 0.0
      %668 = vmatprep.subr.mxu0 0.0
      %669 = vmatpush1.msra.mxu0 0.0
      %670 = vmatprep.subr.mxu0 0.0
      %671 = vmatpush1.msra.mxu0 0.0
      %672 = vmatprep.subr.mxu0 0.0
      %673 = vmatpush1.msra.mxu0 0.0
      %674 = vmatprep.subr.mxu0 0.0
      %675 = vmatpush1.msra.mxu0 0.0
      %676 = vmatprep.subr.mxu0 0.0
      %677 = vmatpush1.msra.mxu0 0.0
      %678 = vmatprep.subr.mxu0 0.0
      %679 = vmatpush1.msra.mxu0 0.0
      %680 = vmatprep.subr.mxu0 0.0
      %681 = vmatpush1.msra.mxu0 0.0
      %682 = vmatprep.subr.mxu0 0.0
      %683 = vmatpush1.msra.mxu0 0.0
      %684 = vmatprep.subr.mxu0 0.0
      %685 = vmatpush1.msra.mxu0 0.0
      %686 = vmatprep.subr.mxu0 0.0
      %687 = vmatpush1.msra.mxu0 0.0
      %688 = vmatprep.subr.mxu0 0.0
      %689 = vmatpush1.msra.mxu0 0.0
      %690 = vmatprep.subr.mxu0 0.0
      %691 = vmatpush1.msra.mxu0 0.0
      %692 = vmatprep.subr.mxu0 0.0
      %693 = vmatpush1.msra.mxu0 0.0
      %694 = vmatprep.subr.mxu0 0.0
      %695 = vmatpush1.msra.mxu0 0.0
      %696 = vmatprep.subr.mxu0 0.0
      %697 = vmatpush1.msra.mxu0 0.0
      %698 = vmatprep.subr.mxu0 0.0
      %699 = vmatpush1.msra.mxu0 0.0
      %700 = vmatprep.subr.mxu0 0.0
      %701 = vmatpush1.msra.mxu0 0.0
      %702 = vmatprep.subr.mxu0 0.0
      %703 = vmatpush1.msra.mxu0 0.0
      %704 = vmatprep.subr.mxu0 0.0
      %705 = vmatpush1.msra.mxu0 0.0
      %706 = vmatprep.subr.mxu0 0.0
      %707 = vmatpush1.msra.mxu0 0.0
      %708 = vmatprep.subr.mxu0 0.0
      %709 = vmatpush1.msra.mxu0 0.0
      %710 = vmatprep.subr.mxu0 0.0
      %711 = vmatpush1.msra.mxu0 0.0
      %712 = vmatprep.subr.mxu0 0.0
      %713 = vmatpush1.msra.mxu0 0.0
      %714 = vmatprep.subr.mxu0 0.0
      %715 = vmatpush1.msra.mxu0 0.0
      %716 = vmatprep.subr.mxu0 0.0
      %717 = vmatpush1.msra.mxu0 0.0
      %718 = vmatprep.subr.mxu0 0.0
      %719 = vmatpush1.msra.mxu0 0.0
      %720 = vmatprep.mubr.f32.mxu0 0.0
      %721 = vmatmul.mubr.f32.gmra.mrb[0].mxu0 %v650
      %v722 = vpop.f32.mrb[0].mxu0
      %v723 = vadd.f32 0.0, %v722
      %v724 = vpop.f32.mrb[0].mxu0
      %v725 = vadd.f32 0.0, %v724
      %726 = vdwg.mxu0
      %v727 = vadd.f32 %v645, %v723
      %v728 = vadd.f32 %v646, %v725
      %729 = vrot.lane.b32.xlu0 %v252, 127
      %v730 = vpop.permute.xlu0 %729
      %731 = vrot.lane.b32.xlu0 %v266, 127
      %v732 = vpop.permute.xlu0 %731
      %vm733 = vcmp.lt.s32.totalorder %v254, 127
      %v734 = vsel %vm733, %v730, %v732
      %v735 = vsel %vm733, %v732, %v730
      %v736 = vsel %vm464, %v734, 0.0
      %v737 = vsel %vm465, %v735, 0.0
      %s738 = scalar_lea.vmem %s1, 20
      %v739 = vld [vmem:[%s738] sm:$0xf]
      %v741 = vsel %vm295, %v739, 0
      %v744 = vsel %vm299, %v736, 0
      %v747 = vsel %vm299, %v737, 0
      %749 = vmatprep.subr.mxu0 %v747
      %750 = vmatpush1.msra.mxu0 %v744
      %751 = vmatprep.subr.mxu0 0.0
      %752 = vmatpush1.msra.mxu0 0.0
      %753 = vmatprep.subr.mxu0 0.0
      %754 = vmatpush1.msra.mxu0 0.0
      %755 = vmatprep.subr.mxu0 0.0
      %756 = vmatpush1.msra.mxu0 0.0
      %757 = vmatprep.subr.mxu0 0.0
      %758 = vmatpush1.msra.mxu0 0.0
      %759 = vmatprep.subr.mxu0 0.0
      %760 = vmatpush1.msra.mxu0 0.0
      %761 = vmatprep.subr.mxu0 0.0
      %762 = vmatpush1.msra.mxu0 0.0
      %763 = vmatprep.subr.mxu0 0.0
      %764 = vmatpush1.msra.mxu0 0.0
      %765 = vmatprep.subr.mxu0 0.0
      %766 = vmatpush1.msra.mxu0 0.0
      %767 = vmatprep.subr.mxu0 0.0
      %768 = vmatpush1.msra.mxu0 0.0
      %769 = vmatprep.subr.mxu0 0.0
      %770 = vmatpush1.msra.mxu0 0.0
      %771 = vmatprep.subr.mxu0 0.0
      %772 = vmatpush1.msra.mxu0 0.0
      %773 = vmatprep.subr.mxu0 0.0
      %774 = vmatpush1.msra.mxu0 0.0
      %775 = vmatprep.subr.mxu0 0.0
      %776 = vmatpush1.msra.mxu0 0.0
      %777 = vmatprep.subr.mxu0 0.0
      %778 = vmatpush1.msra.mxu0 0.0
      %779 = vmatprep.subr.mxu0 0.0
      %780 = vmatpush1.msra.mxu0 0.0
      %781 = vmatprep.subr.mxu0 0.0
      %782 = vmatpush1.msra.mxu0 0.0
      %783 = vmatprep.subr.mxu0 0.0
      %784 = vmatpush1.msra.mxu0 0.0
      %785 = vmatprep.subr.mxu0 0.0
      %786 = vmatpush1.msra.mxu0 0.0
      %787 = vmatprep.subr.mxu0 0.0
      %788 = vmatpush1.msra.mxu0 0.0
      %789 = vmatprep.subr.mxu0 0.0
      %790 = vmatpush1.msra.mxu0 0.0
      %791 = vmatprep.subr.mxu0 0.0
      %792 = vmatpush1.msra.mxu0 0.0
      %793 = vmatprep.subr.mxu0 0.0
      %794 = vmatpush1.msra.mxu0 0.0
      %795 = vmatprep.subr.mxu0 0.0
      %796 = vmatpush1.msra.mxu0 0.0
      %797 = vmatprep.subr.mxu0 0.0
      %798 = vmatpush1.msra.mxu0 0.0
      %799 = vmatprep.subr.mxu0 0.0
      %800 = vmatpush1.msra.mxu0 0.0
      %801 = vmatprep.subr.mxu0 0.0
      %802 = vmatpush1.msra.mxu0 0.0
      %803 = vmatprep.subr.mxu0 0.0
      %804 = vmatpush1.msra.mxu0 0.0
      %805 = vmatprep.subr.mxu0 0.0
      %806 = vmatpush1.msra.mxu0 0.0
      %807 = vmatprep.subr.mxu0 0.0
      %808 = vmatpush1.msra.mxu0 0.0
      %809 = vmatprep.subr.mxu0 0.0
      %810 = vmatpush1.msra.mxu0 0.0
      %811 = vmatprep.subr.mxu0 0.0
      %812 = vmatpush1.msra.mxu0 0.0
      %813 = vmatprep.mubr.f32.mxu0 0.0
      %814 = vmatmul.mubr.f32.gmra.mrb[0].mxu0 %v741
      %v815 = vpop.f32.mrb[0].mxu0
      %v816 = vadd.f32 0.0, %v815
      %v817 = vpop.f32.mrb[0].mxu0
      %v818 = vadd.f32 0.0, %v817
      %819 = vdwg.mxu0
      %v820 = vadd.f32 %v727, %v816
      %v821 = vadd.f32 %v728, %v818
      %822 = vrot.lane.b32.xlu0 %v252, 113
      %v823 = vpop.permute.xlu0 %822
      %824 = vrot.lane.b32.xlu0 %v266, 113
      %v825 = vpop.permute.xlu0 %824
      %vm826 = vcmp.lt.s32.totalorder %v254, 113
      %v827 = vsel %vm826, %v823, %v825
      %v828 = vsel %vm826, %v825, %v823
      %vm829 = vcmp.lt.s32.totalorder %v254, 240
      %vm830 = vcmp.lt.s32.totalorder %v255, 240
      %vm831 = vmand %vm829, %vm277
      %vm832 = vmand %vm830, %vm278
      %v833 = vsel %vm831, %v827, 0.0
      %v834 = vsel %vm832, %v828, 0.0
      %s835 = scalar_lea.vmem %s1, 24
      %v836 = vld [vmem:[%s835] sm:$0xf]
      %v838 = vsel %vm295, %v836, 0
      %v841 = vsel %vm299, %v833, 0
      %v844 = vsel %vm299, %v834, 0
      %846 = vmatprep.subr.mxu0 %v844
      %847 = vmatpush1.msra.mxu0 %v841
      %848 = vmatprep.subr.mxu0 0.0
      %849 = vmatpush1.msra.mxu0 0.0
      %850 = vmatprep.subr.mxu0 0.0
      %851 = vmatpush1.msra.mxu0 0.0
      %852 = vmatprep.subr.mxu0 0.0
      %853 = vmatpush1.msra.mxu0 0.0
      %854 = vmatprep.subr.mxu0 0.0
      %855 = vmatpush1.msra.mxu0 0.0
      %856 = vmatprep.subr.mxu0 0.0
      %857 = vmatpush1.msra.mxu0 0.0
      %858 = vmatprep.subr.mxu0 0.0
      %859 = vmatpush1.msra.mxu0 0.0
      %860 = vmatprep.subr.mxu0 0.0
      %861 = vmatpush1.msra.mxu0 0.0
      %862 = vmatprep.subr.mxu0 0.0
      %863 = vmatpush1.msra.mxu0 0.0
      %864 = vmatprep.subr.mxu0 0.0
      %865 = vmatpush1.msra.mxu0 0.0
      %866 = vmatprep.subr.mxu0 0.0
      %867 = vmatpush1.msra.mxu0 0.0
      %868 = vmatprep.subr.mxu0 0.0
      %869 = vmatpush1.msra.mxu0 0.0
      %870 = vmatprep.subr.mxu0 0.0
      %871 = vmatpush1.msra.mxu0 0.0
      %872 = vmatprep.subr.mxu0 0.0
      %873 = vmatpush1.msra.mxu0 0.0
      %874 = vmatprep.subr.mxu0 0.0
      %875 = vmatpush1.msra.mxu0 0.0
      %876 = vmatprep.subr.mxu0 0.0
      %877 = vmatpush1.msra.mxu0 0.0
      %878 = vmatprep.subr.mxu0 0.0
      %879 = vmatpush1.msra.mxu0 0.0
      %880 = vmatprep.subr.mxu0 0.0
      %881 = vmatpush1.msra.mxu0 0.0
      %882 = vmatprep.subr.mxu0 0.0
      %883 = vmatpush1.msra.mxu0 0.0
      %884 = vmatprep.subr.mxu0 0.0
      %885 = vmatpush1.msra.mxu0 0.0
      %886 = vmatprep.subr.mxu0 0.0
      %887 = vmatpush1.msra.mxu0 0.0
      %888 = vmatprep.subr.mxu0 0.0
      %889 = vmatpush1.msra.mxu0 0.0
      %890 = vmatprep.subr.mxu0 0.0
      %891 = vmatpush1.msra.mxu0 0.0
      %892 = vmatprep.subr.mxu0 0.0
      %893 = vmatpush1.msra.mxu0 0.0
      %894 = vmatprep.subr.mxu0 0.0
      %895 = vmatpush1.msra.mxu0 0.0
      %896 = vmatprep.subr.mxu0 0.0
      %897 = vmatpush1.msra.mxu0 0.0
      %898 = vmatprep.subr.mxu0 0.0
      %899 = vmatpush1.msra.mxu0 0.0
      %900 = vmatprep.subr.mxu0 0.0
      %901 = vmatpush1.msra.mxu0 0.0
      %902 = vmatprep.subr.mxu0 0.0
      %903 = vmatpush1.msra.mxu0 0.0
      %904 = vmatprep.subr.mxu0 0.0
      %905 = vmatpush1.msra.mxu0 0.0
      %906 = vmatprep.subr.mxu0 0.0
      %907 = vmatpush1.msra.mxu0 0.0
      %908 = vmatprep.subr.mxu0 0.0
      %909 = vmatpush1.msra.mxu0 0.0
      %910 = vmatprep.mubr.f32.mxu0 0.0
      %911 = vmatmul.mubr.f32.gmra.mrb[0].mxu0 %v838
      %v912 = vpop.f32.mrb[0].mxu0
      %v913 = vadd.f32 0.0, %v912
      %v914 = vpop.f32.mrb[0].mxu0
      %v915 = vadd.f32 0.0, %v914
      %916 = vdwg.mxu0
      %v917 = vadd.f32 %v820, %v913
      %v918 = vadd.f32 %v821, %v915
      %919 = vrot.lane.b32.xlu0 %v252, 112
      %v920 = vpop.permute.xlu0 %919
      %921 = vrot.lane.b32.xlu0 %v266, 112
      %v922 = vpop.permute.xlu0 %921
      %vm923 = vcmp.lt.s32.totalorder %v254, 112
      %v924 = vsel %vm923, %v920, %v922
      %v925 = vsel %vm923, %v922, %v920
      %v926 = vsel %vm829, %v924, 0.0
      %v927 = vsel %vm830, %v925, 0.0
      %s928 = scalar_lea.vmem %s1, 28
      %v929 = vld [vmem:[%s928] sm:$0xf]
      %v931 = vsel %vm295, %v929, 0
      %v934 = vsel %vm299, %v926, 0
      %v937 = vsel %vm299, %v927, 0
      %939 = vmatprep.subr.mxu0 %v937
      %940 = vmatpush1.msra.mxu0 %v934
      %941 = vmatprep.subr.mxu0 0.0
      %942 = vmatpush1.msra.mxu0 0.0
      %943 = vmatprep.subr.mxu0 0.0
      %944 = vmatpush1.msra.mxu0 0.0
      %945 = vmatprep.subr.mxu0 0.0
      %946 = vmatpush1.msra.mxu0 0.0
      %947 = vmatprep.subr.mxu0 0.0
      %948 = vmatpush1.msra.mxu0 0.0
      %949 = vmatprep.subr.mxu0 0.0
      %950 = vmatpush1.msra.mxu0 0.0
      %951 = vmatprep.subr.mxu0 0.0
      %952 = vmatpush1.msra.mxu0 0.0
      %953 = vmatprep.subr.mxu0 0.0
      %954 = vmatpush1.msra.mxu0 0.0
      %955 = vmatprep.subr.mxu0 0.0
      %956 = vmatpush1.msra.mxu0 0.0
      %957 = vmatprep.subr.mxu0 0.0
      %958 = vmatpush1.msra.mxu0 0.0
      %959 = vmatprep.subr.mxu0 0.0
      %960 = vmatpush1.msra.mxu0 0.0
      %961 = vmatprep.subr.mxu0 0.0
      %962 = vmatpush1.msra.mxu0 0.0
      %963 = vmatprep.subr.mxu0 0.0
      %964 = vmatpush1.msra.mxu0 0.0
      %965 = vmatprep.subr.mxu0 0.0
      %966 = vmatpush1.msra.mxu0 0.0
      %967 = vmatprep.subr.mxu0 0.0
      %968 = vmatpush1.msra.mxu0 0.0
      %969 = vmatprep.subr.mxu0 0.0
      %970 = vmatpush1.msra.mxu0 0.0
      %971 = vmatprep.subr.mxu0 0.0
      %972 = vmatpush1.msra.mxu0 0.0
      %973 = vmatprep.subr.mxu0 0.0
      %974 = vmatpush1.msra.mxu0 0.0
      %975 = vmatprep.subr.mxu0 0.0
      %976 = vmatpush1.msra.mxu0 0.0
      %977 = vmatprep.subr.mxu0 0.0
      %978 = vmatpush1.msra.mxu0 0.0
      %979 = vmatprep.subr.mxu0 0.0
      %980 = vmatpush1.msra.mxu0 0.0
      %981 = vmatprep.subr.mxu0 0.0
      %982 = vmatpush1.msra.mxu0 0.0
      %983 = vmatprep.subr.mxu0 0.0
      %984 = vmatpush1.msra.mxu0 0.0
      %985 = vmatprep.subr.mxu0 0.0
      %986 = vmatpush1.msra.mxu0 0.0
      %987 = vmatprep.subr.mxu0 0.0
      %988 = vmatpush1.msra.mxu0 0.0
      %989 = vmatprep.subr.mxu0 0.0
      %990 = vmatpush1.msra.mxu0 0.0
      %991 = vmatprep.subr.mxu0 0.0
      %992 = vmatpush1.msra.mxu0 0.0
      %993 = vmatprep.subr.mxu0 0.0
      %994 = vmatpush1.msra.mxu0 0.0
      %995 = vmatprep.subr.mxu0 0.0
      %996 = vmatpush1.msra.mxu0 0.0
      %997 = vmatprep.subr.mxu0 0.0
      %998 = vmatpush1.msra.mxu0 0.0
      %999 = vmatprep.subr.mxu0 0.0
      %1000 = vmatpush1.msra.mxu0 0.0
      %1001 = vmatprep.subr.mxu0 0.0
      %1002 = vmatpush1.msra.mxu0 0.0
      %1003 = vmatprep.mubr.f32.mxu0 0.0
      %1004 = vmatmul.mubr.f32.gmra.mrb[0].mxu0 %v931
      %v1005 = vpop.f32.mrb[0].mxu0
      %v1006 = vadd.f32 0.0, %v1005
      %v1007 = vpop.f32.mrb[0].mxu0
      %v1008 = vadd.f32 0.0, %v1007
      %1009 = vdwg.mxu0
      %v1010 = vadd.f32 %v917, %v1006
      %v1011 = vadd.f32 %v918, %v1008
      %1012 = vrot.lane.b32.xlu0 %v252, 111
      %v1013 = vpop.permute.xlu0 %1012
      %1014 = vrot.lane.b32.xlu0 %v266, 111
      %v1015 = vpop.permute.xlu0 %1014
      %vm1016 = vcmp.lt.s32.totalorder %v254, 111
      %v1017 = vsel %vm1016, %v1013, %v1015
      %v1018 = vsel %vm1016, %v1015, %v1013
      %vm1019 = vmand %vm829, %vm464
      %vm1020 = vmand %vm830, %vm465
      %v1021 = vsel %vm1019, %v1017, 0.0
      %v1022 = vsel %vm1020, %v1018, 0.0
      %s1023 = scalar_lea.vmem %s1, 32
      %v1024 = vld [vmem:[%s1023] sm:$0xf]
      %v1026 = vsel %vm295, %v1024, 0
      %v1029 = vsel %vm299, %v1021, 0
      %v1032 = vsel %vm299, %v1022, 0
      %1034 = vmatprep.subr.mxu0 %v1032
      %1035 = vmatpush1.msra.mxu0 %v1029
      %1036 = vmatprep.subr.mxu0 0.0
      %1037 = vmatpush1.msra.mxu0 0.0
      %1038 = vmatprep.subr.mxu0 0.0
      %1039 = vmatpush1.msra.mxu0 0.0
      %1040 = vmatprep.subr.mxu0 0.0
      %1041 = vmatpush1.msra.mxu0 0.0
      %1042 = vmatprep.subr.mxu0 0.0
      %1043 = vmatpush1.msra.mxu0 0.0
      %1044 = vmatprep.subr.mxu0 0.0
      %1045 = vmatpush1.msra.mxu0 0.0
      %1046 = vmatprep.subr.mxu0 0.0
      %1047 = vmatpush1.msra.mxu0 0.0
      %1048 = vmatprep.subr.mxu0 0.0
      %1049 = vmatpush1.msra.mxu0 0.0
      %1050 = vmatprep.subr.mxu0 0.0
      %1051 = vmatpush1.msra.mxu0 0.0
      %1052 = vmatprep.subr.mxu0 0.0
      %1053 = vmatpush1.msra.mxu0 0.0
      %1054 = vmatprep.subr.mxu0 0.0
      %1055 = vmatpush1.msra.mxu0 0.0
      %1056 = vmatprep.subr.mxu0 0.0
      %1057 = vmatpush1.msra.mxu0 0.0
      %1058 = vmatprep.subr.mxu0 0.0
      %1059 = vmatpush1.msra.mxu0 0.0
      %1060 = vmatprep.subr.mxu0 0.0
      %1061 = vmatpush1.msra.mxu0 0.0
      %1062 = vmatprep.subr.mxu0 0.0
      %1063 = vmatpush1.msra.mxu0 0.0
      %1064 = vmatprep.subr.mxu0 0.0
      %1065 = vmatpush1.msra.mxu0 0.0
      %1066 = vmatprep.subr.mxu0 0.0
      %1067 = vmatpush1.msra.mxu0 0.0
      %1068 = vmatprep.subr.mxu0 0.0
      %1069 = vmatpush1.msra.mxu0 0.0
      %1070 = vmatprep.subr.mxu0 0.0
      %1071 = vmatpush1.msra.mxu0 0.0
      %1072 = vmatprep.subr.mxu0 0.0
      %1073 = vmatpush1.msra.mxu0 0.0
      %1074 = vmatprep.subr.mxu0 0.0
      %1075 = vmatpush1.msra.mxu0 0.0
      %1076 = vmatprep.subr.mxu0 0.0
      %1077 = vmatpush1.msra.mxu0 0.0
      %1078 = vmatprep.subr.mxu0 0.0
      %1079 = vmatpush1.msra.mxu0 0.0
      %1080 = vmatprep.subr.mxu0 0.0
      %1081 = vmatpush1.msra.mxu0 0.0
      %1082 = vmatprep.subr.mxu0 0.0
      %1083 = vmatpush1.msra.mxu0 0.0
      %1084 = vmatprep.subr.mxu0 0.0
      %1085 = vmatpush1.msra.mxu0 0.0
      %1086 = vmatprep.subr.mxu0 0.0
      %1087 = vmatpush1.msra.mxu0 0.0
      %1088 = vmatprep.subr.mxu0 0.0
      %1089 = vmatpush1.msra.mxu0 0.0
      %1090 = vmatprep.subr.mxu0 0.0
      %1091 = vmatpush1.msra.mxu0 0.0
      %1092 = vmatprep.subr.mxu0 0.0
      %1093 = vmatpush1.msra.mxu0 0.0
      %1094 = vmatprep.subr.mxu0 0.0
      %1095 = vmatpush1.msra.mxu0 0.0
      %1096 = vmatprep.subr.mxu0 0.0
      %1097 = vmatpush1.msra.mxu0 0.0
      %1098 = vmatprep.mubr.f32.mxu0 0.0
      %1099 = vmatmul.mubr.f32.gmra.mrb[0].mxu0 %v1026
      %v1100 = vpop.f32.mrb[0].mxu0
      %v1101 = vadd.f32 0.0, %v1100
      %v1102 = vpop.f32.mrb[0].mxu0
      %v1103 = vadd.f32 0.0, %v1102
      %1104 = vdwg.mxu0
      %v1105 = vadd.f32 %v1010, %v1101
      %v1106 = vadd.f32 %v1011, %v1103
      %v1107 = vld [vmem:[%s2] sm:$0xf]
      %1109 = vset.pattern.permute.xlu0 0
      %1110 = vperm.xlu0 %1109, %v1107
      %v1111 = vpop.permute.xlu0 %1110
      %v1113 = vadd.f32 %v1105, %v1111
      %v1114 = vadd.f32 %v1106, %v1111
      %v1115 = vmax.f32 %v1113, 0.0
      %v1116 = vmax.f32 %v1114, 0.0
      %v1117 = vld [vmem:[%s3] sm:$0xff]
      %v1118 = vld [vmem:[%s4] sm:$0xff]
      %1120 = vset.pattern.permute.xlu0 0
      %1121 = vperm.xlu0 %1120, %v1118
      %v1122 = vpop.permute.xlu0 %1121
      %v1125 = vsel %vm295, %v1117, 0
      %v1128 = vsel %vm299, %v1115, 0
      %v1131 = vsel %vm299, %v1116, 0
      %1133 = vmatprep.subr.mxu0 %v1131
      %1134 = vmatpush1.msra.mxu0 %v1128
      %1135 = vmatprep.subr.mxu0 0.0
      %1136 = vmatpush1.msra.mxu0 0.0
      %1137 = vmatprep.subr.mxu0 0.0
      %1138 = vmatpush1.msra.mxu0 0.0
      %1139 = vmatprep.subr.mxu0 0.0
      %1140 = vmatpush1.msra.mxu0 0.0
      %1141 = vmatprep.subr.mxu0 0.0
      %1142 = vmatpush1.msra.mxu0 0.0
      %1143 = vmatprep.subr.mxu0 0.0
      %1144 = vmatpush1.msra.mxu0 0.0
      %1145 = vmatprep.subr.mxu0 0.0
      %1146 = vmatpush1.msra.mxu0 0.0
      %1147 = vmatprep.subr.mxu0 0.0
      %1148 = vmatpush1.msra.mxu0 0.0
      %1149 = vmatprep.subr.mxu0 0.0
      %1150 = vmatpush1.msra.mxu0 0.0
      %1151 = vmatprep.subr.mxu0 0.0
      %1152 = vmatpush1.msra.mxu0 0.0
      %1153 = vmatprep.subr.mxu0 0.0
      %1154 = vmatpush1.msra.mxu0 0.0
      %1155 = vmatprep.subr.mxu0 0.0
      %1156 = vmatpush1.msra.mxu0 0.0
      %1157 = vmatprep.subr.mxu0 0.0
      %1158 = vmatpush1.msra.mxu0 0.0
      %1159 = vmatprep.subr.mxu0 0.0
      %1160 = vmatpush1.msra.mxu0 0.0
      %1161 = vmatprep.subr.mxu0 0.0
      %1162 = vmatpush1.msra.mxu0 0.0
      %1163 = vmatprep.subr.mxu0 0.0
      %1164 = vmatpush1.msra.mxu0 0.0
      %1165 = vmatprep.subr.mxu0 0.0
      %1166 = vmatpush1.msra.mxu0 0.0
      %1167 = vmatprep.subr.mxu0 0.0
      %1168 = vmatpush1.msra.mxu0 0.0
      %1169 = vmatprep.subr.mxu0 0.0
      %1170 = vmatpush1.msra.mxu0 0.0
      %1171 = vmatprep.subr.mxu0 0.0
      %1172 = vmatpush1.msra.mxu0 0.0
      %1173 = vmatprep.subr.mxu0 0.0
      %1174 = vmatpush1.msra.mxu0 0.0
      %1175 = vmatprep.subr.mxu0 0.0
      %1176 = vmatpush1.msra.mxu0 0.0
      %1177 = vmatprep.subr.mxu0 0.0
      %1178 = vmatpush1.msra.mxu0 0.0
      %1179 = vmatprep.subr.mxu0 0.0
      %1180 = vmatpush1.msra.mxu0 0.0
      %1181 = vmatprep.subr.mxu0 0.0
      %1182 = vmatpush1.msra.mxu0 0.0
      %1183 = vmatprep.subr.mxu0 0.0
      %1184 = vmatpush1.msra.mxu0 0.0
      %1185 = vmatprep.subr.mxu0 0.0
      %1186 = vmatpush1.msra.mxu0 0.0
      %1187 = vmatprep.subr.mxu0 0.0
      %1188 = vmatpush1.msra.mxu0 0.0
      %1189 = vmatprep.subr.mxu0 0.0
      %1190 = vmatpush1.msra.mxu0 0.0
      %1191 = vmatprep.subr.mxu0 0.0
      %1192 = vmatpush1.msra.mxu0 0.0
      %1193 = vmatprep.subr.mxu0 0.0
      %1194 = vmatpush1.msra.mxu0 0.0
      %1195 = vmatprep.subr.mxu0 0.0
      %1196 = vmatpush1.msra.mxu0 0.0
      %1197 = vmatprep.mubr.f32.mxu0 0.0
      %1198 = vmatmul.mubr.f32.gmra.mrb[0].mxu0 %v1125
      %v1199 = vpop.f32.mrb[0].mxu0
      %v1200 = vadd.f32 %v1122, %v1199
      %v1201 = vpop.f32.mrb[0].mxu0
      %v1202 = vadd.f32 %v1122, %v1201
      %1203 = vdwg.mxu0
      %1204 = vst [vmem:[%s251] sm:$0xff] %v1200
      %1205 = vst [vmem:[%s251 + $0x8] sm:$0xff] %v1202
      %p1206 = scmp.lt.s32.totalorder %s17, 1
      %s1207 = scalar_select %p1206, %s17, 1
      %s1208 = smul.addr %s1207, 2
      %s1209 = smul.addr %s1208, 8
      %s1210 = scalar_lea.vmem %s6, %s1209
      // Predicated region
      $region45: #{head_forward.1} parent=43 // pred_check
        %p1211 = pneg %p166
      $region46: #{head_forward.1} parent=43 // pred_check_branch
        %1213 = sbr.rel (%p1211) target = $region48
      $region47: #{head_forward.1} parent=43 // pred_region
        _
      $region48: #{head_forward.1} parent=43 // pred_fallthru
        _
    $region44: #{head_forward.1} parent=5 // pred_fallthru
      _
    %p1214 = scmp.le.s32.totalorder 2, %s12
    // Predicated region
    $region49: #{head_forward.1} parent=5 // pred_check
      %p1215 = pneg %p1214
    $region50: #{head_forward.1} parent=5 // pred_check_branch
      %1217 = sbr.rel (%p1215) target = $region52
    $region51: #{head_forward.1} parent=5 // pred_region
      %s1218 = ssub.s32 %s12, 2
      // Predicated region
      $region53: #{head_forward.1} parent=51 // pred_check
        %p1219 = pneg %p172
      $region54: #{head_forward.1} parent=51 // pred_check_branch
        %1221 = sbr.rel (%p1219) target = $region56
      $region55: #{head_forward.1} parent=51 // pred_region
        %p1222 = scmp.lt.s32.totalorder %s18, 1
        %s1223 = scalar_select %p1222, %s18, 1
        %s1224 = smul.addr %s1223, 2
        %s1225 = smul.addr %s1224, 8
        %s1226 = scalar_lea.vmem %s6, %s1225
      $region56: #{head_forward.1} parent=51 // pred_fallthru
        _
    $region52: #{head_forward.1} parent=5 // pred_fallthru
      _
  $region6: #{head_forward.1} parent=0 // loop_footer
    %s16 = sadd.s32 1, %s12
  $region7: #{head_forward.1} parent=0 // loop_footer_branch
    %11 = sbr.rel target = $region3
  $region8: #{head_forward.1} parent=0 // loop_exit
    _

</llo_original>
